<compile_context>
chip_gen: v7x
topology: tpu7x:2x2x1
jax: 0.10.0
libtpu: 0.0.40
codegen_flags: <defaults>
</compile_context>

<pallas_src>
import functools

import numpy as np
import jax
import jax.numpy as jnp
from jax.experimental import pallas as pl
from jax.experimental.pallas import tpu as pltpu


def _sampler_kernel(tok_ref, allow_ref, w_ref, cdf_ref, u_ref, out_ref, *, vocab):
    # tok_ref / allow_ref: scalar-prefetched int32[B] in SMEM.
    b = pl.program_id(0)
    token = tok_ref[b]
    allow = allow_ref[b]

    w = w_ref[...]      # (V, 1) f32  : freq ** 0.75
    cdf = cdf_ref[...]  # (V, 1) f32  : inclusive cumsum of w (precomputed in f64)

    row = jax.lax.broadcasted_iota(jnp.int32, (vocab, 1), dimension=0)

    # Weight of `token` (masked sublane reduce), kept 2D as (1, 1).
    w_tok = jnp.sum(jnp.where(row == token, w, 0.0), axis=0, keepdims=True)

    # allow_self == 0  ->  remove token's mass from the CDF tail (j >= token),
    # which makes cdf'[token] == cdf'[token-1] so `token` gets probability 0.
    adj = jnp.where(jnp.logical_and(allow == 0, row >= token), w_tok, 0.0)
    cdf_adj = cdf - adj                                  # (V, 1)
    total = cdf_adj[vocab - 1:vocab, :]                  # (1, 1)

    # Uniform draws in [0, 1) -> targets in [0, total).
    u = u_ref[...]                                       # (1, N) f32
    target = u * total                                   # (1, N)

    # Inverse-CDF lookup: idx_i = #{ j : cdf'[j] <= target_i }
    # Compare as (V-sublane x N-lane) so the reduce produces a lane-dense row.
    cmp = (cdf_adj <= target).astype(jnp.int32)          # (V, N)
    idx = jnp.sum(cmp, axis=0, keepdims=True)            # (1, N)
    # TODO(synk): total == 0 (all weights zero / only the masked token nonzero)
    # is clamped to vocab-1 here, whereas torch.multinomial raises.
    out_ref[...] = jnp.minimum(idx, vocab - 1)


class SimpleSampler:
    """JAX/Pallas port of treelang.ns_sample.SimpleSampler."""

    def __init__(self, nsamples, frequencies, replacement=True):
        # TODO(synk): replacement=False (sampling without replacement) has no
        # clean single-pass Pallas equivalent; only replacement=True is implemented.
        assert replacement, "only replacement=True is supported"
        self.nsamples = int(nsamples)
        self.vocab = int(np.asarray(frequencies).shape[0])

        # Host-side precompute (f64 cumsum to avoid swallowing tiny weights).
        w64 = np.asarray(frequencies, dtype=np.float64) ** 0.75
        cdf64 = np.cumsum(w64)
        self._w_col = jnp.asarray(w64, dtype=jnp.float32).reshape(self.vocab, 1)
        self._cdf_col = jnp.asarray(cdf64, dtype=jnp.float32).reshape(self.vocab, 1)

        self._calls = {}  # batch size -> compiled pallas_call

    # ------------------------------------------------------------------ #

    def _get_call(self, batch):
        if batch in self._calls:
            return self._calls[batch]
        V, N = self.vocab, self.nsamples
        grid_spec = pltpu.PrefetchScalarGridSpec(
            num_scalar_prefetch=2,                 # tokens, allow flags (SMEM)
            grid=(batch,),
            in_specs=[
                pl.BlockSpec((V, 1), lambda b, tok, alw: (0, 0)),        # w  (resident)
                pl.BlockSpec((V, 1), lambda b, tok, alw: (0, 0)),        # cdf (resident)
                pl.BlockSpec((None, 1, N), lambda b, tok, alw: (b, 0, 0)),  # uniforms
            ],
            out_specs=pl.BlockSpec((None, 1, N), lambda b, tok, alw: (b, 0, 0)),
        )
        call = pl.pallas_call(
            functools.partial(_sampler_kernel, vocab=V),
            out_shape=jax.ShapeDtypeStruct((batch, 1, N), jnp.int32),
            grid_spec=grid_spec,
            compiler_params=pltpu.CompilerParams(
                dimension_semantics=("parallel",)),
        )
        self._calls[batch] = call
        return call

    # ------------------------------------------------------------------ #

    def sample_batch(self, tokens, allow_self, seed=0, key=None):
        """Batched draws: one pallas_call for B (token, allow_self) pairs."""
        tokens = jnp.asarray(tokens, dtype=jnp.int32).reshape(-1)
        allow = jnp.asarray(allow_self, dtype=jnp.int32).reshape(-1)
        batch = int(tokens.shape[0])
        if key is None:
            key = jax.random.PRNGKey(seed)
        u = jax.random.uniform(key, (batch, 1, self.nsamples), dtype=jnp.float32)
        out = self._get_call(batch)(tokens, allow, self._w_col, self._cdf_col, u)
        return out.reshape(batch, self.nsamples)

    def forward(self, token, allow_self=True, seed=0, key=None):
        negs = self.sample_batch(
            jnp.array([token], dtype=jnp.int32),
            jnp.array([1 if allow_self else 0], dtype=jnp.int32),
            seed=seed, key=key)
        return negs.reshape(self.nsamples)  # int32 indices (torch returns int64)

    __call__ = forward


if __name__ == "__main__":
    V = 128          # vocabulary size
    N = 16           # nsamples
    B = 4            # batched draws

    key = jax.random.PRNGKey(0)
    base_freq = jax.random.uniform(key, (V,), minval=0.5, maxval=10.0,
                                   dtype=jnp.float32)

    sampler = SimpleSampler(nsamples=N, frequencies=base_freq, replacement=True)

    # Single draw, allow_self=True
    negs_a = sampler.forward(token=5, allow_self=True, seed=1234)
    negs_a = jax.block_until_ready(negs_a)

    # Single draw, allow_self=False (token 5 masked out for this call)
    negs_b = sampler.forward(token=5, allow_self=False, seed=5678)
    negs_b = jax.block_until_ready(negs_b)

    # Batched draws in one launch
    tokens = jnp.array([3, 7, 11, 5], dtype=jnp.int32)
    allow = jnp.array([1, 0, 1, 0], dtype=jnp.int32)
    negs_c = sampler.sample_batch(tokens, allow, seed=42)
    negs_c = jax.block_until_ready(negs_c)

    assert negs_a.shape == (N,) and negs_b.shape == (N,)
    assert negs_c.shape == (B, N)
    assert negs_a.dtype == jnp.int32 and negs_b.dtype == jnp.int32
    assert negs_c.dtype == jnp.int32
    assert bool(jnp.all((negs_a >= 0) & (negs_a < V)))
    assert bool(jnp.all((negs_b >= 0) & (negs_b < V)))
    assert bool(jnp.all((negs_c >= 0) & (negs_c < V)))
    # Masked token must never be sampled when allow_self=False.
    assert not bool(jnp.any(negs_b == 5))
    assert not bool(jnp.any(negs_c[1] == 7))
    assert not bool(jnp.any(negs_c[3] == 5))

    print("KERNEL_OK")
</pallas_src>

<mosaic_0001>
module attributes {stable_mosaic.version = 11 : i64} {
  func.func @_sampler_kernel(%arg0: i32, %arg1: memref<1xi32, #tpu.memory_space<smem>>, %arg2: memref<1xi32, #tpu.memory_space<smem>>, %arg3: memref<128x1xf32, #tpu.memory_space<vmem>>, %arg4: memref<128x1xf32, #tpu.memory_space<vmem>>, %arg5: memref<1x1x16xf32, #tpu.memory_space<vmem>>, %arg6: memref<1x1x16xi32, #tpu.memory_space<vmem>>) attributes {dimension_semantics = [#tpu.dimension_semantics<parallel>], iteration_bounds = array<i64: 1>, scalar_prefetch = 2 : i64, scratch_operands = 0 : i64, tpu.core_type = #tpu.core_type<tc>, window_params = [{pipeline_mode = #tpu.pipeline_mode<synchronous>, transform_indices = @transform_0, window_bounds = array<i64: 128, 1>}, {pipeline_mode = #tpu.pipeline_mode<synchronous>, transform_indices = @transform_1, window_bounds = array<i64: 128, 1>}, {transform_indices = @transform_2, window_bounds = array<i64: 1, 1, 16>}, {transform_indices = @transform_3, window_bounds = array<i64: 1, 1, 16>}]} {
    %0 = arith.index_cast %arg0 : i32 to index
    %1 = memref.load %arg1[%0] : memref<1xi32, #tpu.memory_space<smem>>
    %2 = arith.index_cast %arg0 : i32 to index
    %3 = memref.load %arg2[%2] : memref<1xi32, #tpu.memory_space<smem>>
    %c0 = arith.constant 0 : index
    %c0_0 = arith.constant 0 : index
    %4 = vector.load %arg3[%c0, %c0_0] : memref<128x1xf32, #tpu.memory_space<vmem>>, vector<128x1xf32>
    %c0_1 = arith.constant 0 : index
    %c0_2 = arith.constant 0 : index
    %5 = vector.load %arg4[%c0_1, %c0_2] : memref<128x1xf32, #tpu.memory_space<vmem>>, vector<128x1xf32>
    %6 = tpu.iota {dimensions = array<i32: 0>} : vector<128x1xi32>
    %7 = vector.broadcast %1 : i32 to vector<128x1xi32>
    %8 = arith.cmpi eq, %6, %7 : vector<128x1xi32>
    %cst = arith.constant 0.000000e+00 : f32
    %9 = vector.broadcast %cst : f32 to vector<128x1xf32>
    %10 = arith.select %8, %4, %9 : vector<128x1xi1>, vector<128x1xf32>
    %cst_3 = arith.constant dense<0.000000e+00> : vector<1xf32>
    %11 = vector.multi_reduction <add>, %10, %cst_3 [0] : vector<128x1xf32> to vector<1xf32>
    %12 = vector.shape_cast %11 : vector<1xf32> to vector<1x1xf32>
    %c0_i32 = arith.constant 0 : i32
    %13 = arith.cmpi eq, %3, %c0_i32 : i32
    %14 = vector.broadcast %1 : i32 to vector<128x1xi32>
    %15 = arith.cmpi sge, %6, %14 : vector<128x1xi32>
    %16 = vector.broadcast %13 : i1 to vector<128x1xi1>
    %17 = arith.andi %16, %15 : vector<128x1xi1>
    %cst_4 = arith.constant 0.000000e+00 : f32
    %18 = vector.shape_cast %12 : vector<1x1xf32> to vector<1x1xf32>
    %19 = vector.broadcast %18 : vector<1x1xf32> to vector<128x1xf32>
    %20 = vector.broadcast %cst_4 : f32 to vector<128x1xf32>
    %21 = arith.select %17, %19, %20 : vector<128x1xi1>, vector<128x1xf32>
    %22 = arith.subf %5, %21 : vector<128x1xf32>
    %23 = vector.extract_strided_slice %22 {offsets = [127, 0], sizes = [1, 1], strides = [1, 1]} : vector<128x1xf32> to vector<1x1xf32>
    %c0_5 = arith.constant 0 : index
    %c0_6 = arith.constant 0 : index
    %c0_7 = arith.constant 0 : index
    %24 = vector.load %arg5[%c0_5, %c0_6, %c0_7] : memref<1x1x16xf32, #tpu.memory_space<vmem>>, vector<1x1x16xf32>
    %25 = vector.shape_cast %24 : vector<1x1x16xf32> to vector<1x16xf32>
    %26 = vector.broadcast %23 : vector<1x1xf32> to vector<1x16xf32>
    %27 = arith.mulf %25, %26 : vector<1x16xf32>
    %28 = vector.broadcast %22 : vector<128x1xf32> to vector<128x16xf32>
    %29 = vector.broadcast %27 : vector<1x16xf32> to vector<128x16xf32>
    %30 = arith.cmpf ole, %28, %29 : vector<128x16xf32>
    %31 = arith.extui %30 : vector<128x16xi1> to vector<128x16xi32>
    %cst_8 = arith.constant dense<0> : vector<16xi32>
    %32 = vector.multi_reduction <add>, %31, %cst_8 [0] : vector<128x16xi32> to vector<16xi32>
    %33 = vector.shape_cast %32 : vector<16xi32> to vector<1x16xi32>
    %c127_i32 = arith.constant 127 : i32
    %34 = vector.broadcast %c127_i32 : i32 to vector<1x16xi32>
    %35 = arith.minsi %33, %34 : vector<1x16xi32>
    %c0_9 = arith.constant 0 : index
    %c0_10 = arith.constant 0 : index
    %c0_11 = arith.constant 0 : index
    %36 = vector.load %arg6[%c0_9, %c0_10, %c0_11] : memref<1x1x16xi32, #tpu.memory_space<vmem>>, vector<1x1x16xi32>
    %37 = vector.shape_cast %36 : vector<1x1x16xi32> to vector<1x16xi32>
    %38 = vector.shape_cast %35 : vector<1x16xi32> to vector<1x1x16xi32>
    tpu.vector_store %arg6[%c0_9, %c0_10, %c0_11], %38 {strides = array<i32>} : memref<1x1x16xi32, #tpu.memory_space<vmem>>, vector<1x1x16xi32>,
    return
  }
  func.func @transform_0(%arg0: i32, %arg1: memref<1xi32, #tpu.memory_space<smem>>, %arg2: memref<1xi32, #tpu.memory_space<smem>>) -> (i32, i32) {
    %c0_i32 = arith.constant 0 : i32
    %c0_i32_0 = arith.constant 0 : i32
    %c0_i32_1 = arith.constant 0 : i32
    return %c0_i32, %c0_i32_0 : i32, i32
  }
  func.func @transform_1(%arg0: i32, %arg1: memref<1xi32, #tpu.memory_space<smem>>, %arg2: memref<1xi32, #tpu.memory_space<smem>>) -> (i32, i32) {
    %c0_i32 = arith.constant 0 : i32
    %c0_i32_0 = arith.constant 0 : i32
    %c0_i32_1 = arith.constant 0 : i32
    return %c0_i32, %c0_i32_0 : i32, i32
  }
  func.func @transform_2(%arg0: i32, %arg1: memref<1xi32, #tpu.memory_space<smem>>, %arg2: memref<1xi32, #tpu.memory_space<smem>>) -> (i32, i32, i32) {
    %c0_i32 = arith.constant 0 : i32
    %c0_i32_0 = arith.constant 0 : i32
    %c0_i32_1 = arith.constant 0 : i32
    return %arg0, %c0_i32, %c0_i32_0 : i32, i32, i32
  }
  func.func @transform_3(%arg0: i32, %arg1: memref<1xi32, #tpu.memory_space<smem>>, %arg2: memref<1xi32, #tpu.memory_space<smem>>) -> (i32, i32, i32) {
    %c0_i32 = arith.constant 0 : i32
    %c0_i32_0 = arith.constant 0 : i32
    %c0_i32_1 = arith.constant 0 : i32
    return %arg0, %c0_i32, %c0_i32_0 : i32, i32, i32
  }
}

</mosaic_0001>

<llo_original>
// kernel: tpu_custom_call.1
$region0: #{tpu_custom_call.1}
  #allocation0 [shape = 'u32[]', space=smem, size = 0x4, offset = 0x4, fixed_abs, tag = 'smem constant byte address 0x4 - core index']
  #allocation1 [shape = 'u32[144,128]{1,0:T(1,128)}', space=vmem, size = 0x12000, scoped, tag = 'internal scratch']
  #allocation2 [shape = 's32[1]{0}', space=sflag, size = 0x4, scoped, tag = 'scoped memory for tpu_custom_call.1']
  #allocation3 [shape = 's32[1]{0:T(128)S(6)}', space=smem, size = 0x200, scoped, tag = 'prefetched SMEM operand 0']
  #allocation4 [shape = 's32[1]{0:T(128)S(6)}', space=smem, size = 0x200, scoped, tag = 'prefetched SMEM operand 1']
  %s0 = inlined_call_operand.<no memory space> [shape: s32[1], index: 0, kind: input, shape index: {}]
  %s1 = inlined_call_operand.<no memory space> [shape: s32[1], index: 1, kind: input, shape index: {}]
  %s2 = inlined_call_operand.vmem [shape: f32[128,1], index: 2, kind: input, shape index: {}]
  %s3 = inlined_call_operand.vmem [shape: f32[128,1], index: 3, kind: input, shape index: {}]
  %s4 = inlined_call_operand.vmem [shape: f32[1,1,16], index: 4, kind: input, shape index: {}]
  %s5 = inlined_call_operand.hbm [shape: s32[1,1,16], index: 5, kind: output, shape index: {}]
  %s6 = sld [smem:[#allocation0]]
  $region22: #{tpu_custom_call.1} parent=0
    _
  %s8 = ssub.s32 1, %s6
  %s9 = scalar_select 0, %s8, %s6
  %10 = sst [smem:[#allocation3]] %s0
  %11 = sst [smem:[#allocation4]] %s1
  $region1: #{tpu_custom_call.1} parent=0
    #allocation5 [shape = 'u8[512]{0}', space=vmem, size = 0x400, scoped, tag = 'output window, operand 0, single buffered']
    #allocation6 [shape = 's32[1]{0}', space=sflag, size = 0x4, scoped, tag = 'scoped memory for tpu_custom_call.1']
    %12 = vsyncpa [#allocation6], 0
    // Predicated region
    $region2: #{tpu_custom_call.1} parent=1 // pred_check
      _
    $region3: #{tpu_custom_call.1} parent=1 // pred_check_branch
      %14 = sbr.rel (0) target = $region5
    $region4: #{tpu_custom_call.1} parent=1 // pred_region
      _
    $region5: #{tpu_custom_call.1} parent=1 // pred_fallthru
      _
    // Predicated region
    $region6: #{tpu_custom_call.1} parent=1 // pred_check
      _
    $region7: #{tpu_custom_call.1} parent=1 // pred_check_branch
      %16 = sbr.rel (0) target = $region9
    $region8: #{tpu_custom_call.1} parent=1 // pred_region
      _
    $region9: #{tpu_custom_call.1} parent=1 // pred_fallthru
      _
    // Predicated region
    $region10: #{tpu_custom_call.1} parent=1 // pred_check
      _
    $region11: #{tpu_custom_call.1} parent=1 // pred_check_branch
      %18 = sbr.rel (0) target = $region13
    $region12: #{tpu_custom_call.1} parent=1 // pred_region
      _
    $region13: #{tpu_custom_call.1} parent=1 // pred_fallthru
      _
    %s19 = sld [smem:[#allocation3]]
    %s20 = sld [smem:[#allocation4]]
    %v21 = vld [vmem:[%s2] sm:$0xff]
    %v22 = vld [vmem:[%s2 + $0x8] sm:$0xff]
    %v23 = vld [vmem:[%s2 + $0x10] sm:$0xff]
    %v24 = vld [vmem:[%s2 + $0x18] sm:$0xff]
    %v25 = vld [vmem:[%s2 + $0x20] sm:$0xff]
    %v26 = vld [vmem:[%s2 + $0x28] sm:$0xff]
    %v27 = vld [vmem:[%s2 + $0x30] sm:$0xff]
    %v28 = vld [vmem:[%s2 + $0x38] sm:$0xff]
    %v29 = vld [vmem:[%s2 + $0x40] sm:$0xff]
    %v30 = vld [vmem:[%s2 + $0x48] sm:$0xff]
    %v31 = vld [vmem:[%s2 + $0x50] sm:$0xff]
    %v32 = vld [vmem:[%s2 + $0x58] sm:$0xff]
    %v33 = vld [vmem:[%s2 + $0x60] sm:$0xff]
    %v34 = vld [vmem:[%s2 + $0x68] sm:$0xff]
    %v35 = vld [vmem:[%s2 + $0x70] sm:$0xff]
    %v36 = vld [vmem:[%s2 + $0x78] sm:$0xff]
    %v37 = vld [vmem:[%s3] sm:$0xff]
    %v38 = vld [vmem:[%s3 + $0x8] sm:$0xff]
    %v39 = vld [vmem:[%s3 + $0x10] sm:$0xff]
    %v40 = vld [vmem:[%s3 + $0x18] sm:$0xff]
    %v41 = vld [vmem:[%s3 + $0x20] sm:$0xff]
    %v42 = vld [vmem:[%s3 + $0x28] sm:$0xff]
    %v43 = vld [vmem:[%s3 + $0x30] sm:$0xff]
    %v44 = vld [vmem:[%s3 + $0x38] sm:$0xff]
    %v45 = vld [vmem:[%s3 + $0x40] sm:$0xff]
    %v46 = vld [vmem:[%s3 + $0x48] sm:$0xff]
    %v47 = vld [vmem:[%s3 + $0x50] sm:$0xff]
    %v48 = vld [vmem:[%s3 + $0x58] sm:$0xff]
    %v49 = vld [vmem:[%s3 + $0x60] sm:$0xff]
    %v50 = vld [vmem:[%s3 + $0x68] sm:$0xff]
    %v51 = vld [vmem:[%s3 + $0x70] sm:$0xff]
    %v52 = vld [vmem:[%s3 + $0x78] sm:$0xff]
    %v53 = vlaneseq
    %v54 = vshrl.u32 %v53, 7
    %v55 = vadd.s32 %v54, 8
    %v56 = vadd.s32 %v54, 16
    %v57 = vadd.s32 %v54, 24
    %v58 = vadd.s32 %v54, 32
    %v59 = vadd.s32 %v54, 40
    %v60 = vadd.s32 %v54, 48
    %v61 = vadd.s32 %v54, 56
    %v62 = vadd.s32 %v54, 64
    %v63 = vadd.s32 %v54, 72
    %v64 = vadd.s32 %v54, 80
    %v65 = vadd.s32 %v54, 88
    %v66 = vadd.s32 %v54, 96
    %v67 = vadd.s32 %v54, 104
    %v68 = vadd.s32 %v54, 112
    %v69 = vadd.s32 %v54, 120
    %v70 = vstv %s19
    %vm71 = vcmp.eq.s32.totalorder %v54, %v70
    %vm72 = vcmp.eq.s32.totalorder %v55, %v70
    %vm73 = vcmp.eq.s32.totalorder %v56, %v70
    %vm74 = vcmp.eq.s32.totalorder %v57, %v70
    %vm75 = vcmp.eq.s32.totalorder %v58, %v70
    %vm76 = vcmp.eq.s32.totalorder %v59, %v70
    %vm77 = vcmp.eq.s32.totalorder %v60, %v70
    %vm78 = vcmp.eq.s32.totalorder %v61, %v70
    %vm79 = vcmp.eq.s32.totalorder %v62, %v70
    %vm80 = vcmp.eq.s32.totalorder %v63, %v70
    %vm81 = vcmp.eq.s32.totalorder %v64, %v70
    %vm82 = vcmp.eq.s32.totalorder %v65, %v70
    %vm83 = vcmp.eq.s32.totalorder %v66, %v70
    %vm84 = vcmp.eq.s32.totalorder %v67, %v70
    %vm85 = vcmp.eq.s32.totalorder %v68, %v70
    %vm86 = vcmp.eq.s32.totalorder %v69, %v70
    %v87 = vsel %vm71, %v21, 0.0
    %v88 = vsel %vm72, %v22, 0.0
    %v89 = vsel %vm73, %v23, 0.0
    %v90 = vsel %vm74, %v24, 0.0
    %v91 = vsel %vm75, %v25, 0.0
    %v92 = vsel %vm76, %v26, 0.0
    %v93 = vsel %vm77, %v27, 0.0
    %v94 = vsel %vm78, %v28, 0.0
    %v95 = vsel %vm79, %v29, 0.0
    %v96 = vsel %vm80, %v30, 0.0
    %v97 = vsel %vm81, %v31, 0.0
    %v98 = vsel %vm82, %v32, 0.0
    %v99 = vsel %vm83, %v33, 0.0
    %v100 = vsel %vm84, %v34, 0.0
    %v101 = vsel %vm85, %v35, 0.0
    %v102 = vsel %vm86, %v36, 0.0
    %vm103 = vcmask 7168
    %v104 = vsel %vm103, %v87, 0.0
    %v105 = vsel %vm103, %v88, 0.0
    %v106 = vadd.f32 %v104, %v105
    %v107 = vsel %vm103, %v89, 0.0
    %v108 = vadd.f32 %v106, %v107
    %v109 = vsel %vm103, %v90, 0.0
    %v110 = vadd.f32 %v108, %v109
    %v111 = vsel %vm103, %v91, 0.0
    %v112 = vadd.f32 %v110, %v111
    %v113 = vsel %vm103, %v92, 0.0
    %v114 = vadd.f32 %v112, %v113
    %v115 = vsel %vm103, %v93, 0.0
    %v116 = vadd.f32 %v114, %v115
    %v117 = vsel %vm103, %v94, 0.0
    %v118 = vadd.f32 %v116, %v117
    %v119 = vsel %vm103, %v95, 0.0
    %v120 = vadd.f32 %v118, %v119
    %v121 = vsel %vm103, %v96, 0.0
    %v122 = vadd.f32 %v120, %v121
    %v123 = vsel %vm103, %v97, 0.0
    %v124 = vadd.f32 %v122, %v123
    %v125 = vsel %vm103, %v98, 0.0
    %v126 = vadd.f32 %v124, %v125
    %v127 = vsel %vm103, %v99, 0.0
    %v128 = vadd.f32 %v126, %v127
    %v129 = vsel %vm103, %v100, 0.0
    %v130 = vadd.f32 %v128, %v129
    %v131 = vsel %vm103, %v101, 0.0
    %v132 = vadd.f32 %v130, %v131
    %v133 = vsel %vm103, %v102, 0.0
    %v134 = vadd.f32 %v132, %v133
    %v135 = vrot.slane %v134, 4
    %v136 = vadd.f32 %v134, %v135
    %v137 = vrot.slane %v136, 2
    %v138 = vadd.f32 %v136, %v137
    %v139 = vrot.slane %v138, 1
    %v140 = vadd.f32 %v138, %v139
    %p141 = scmp.eq.s32.totalorder %s20, 0
    %vm142 = vcmp.ge.s32.totalorder %v54, %v70
    %vm143 = vcmp.ge.s32.totalorder %v55, %v70
    %vm144 = vcmp.ge.s32.totalorder %v56, %v70
    %vm145 = vcmp.ge.s32.totalorder %v57, %v70
    %vm146 = vcmp.ge.s32.totalorder %v58, %v70
    %vm147 = vcmp.ge.s32.totalorder %v59, %v70
    %vm148 = vcmp.ge.s32.totalorder %v60, %v70
    %vm149 = vcmp.ge.s32.totalorder %v61, %v70
    %vm150 = vcmp.ge.s32.totalorder %v62, %v70
    %vm151 = vcmp.ge.s32.totalorder %v63, %v70
    %vm152 = vcmp.ge.s32.totalorder %v64, %v70
    %vm153 = vcmp.ge.s32.totalorder %v65, %v70
    %vm154 = vcmp.ge.s32.totalorder %v66, %v70
    %vm155 = vcmp.ge.s32.totalorder %v67, %v70
    %vm156 = vcmp.ge.s32.totalorder %v68, %v70
    %vm157 = vcmp.ge.s32.totalorder %v69, %v70
    %s158 = scalar_select %p141, 1, 0
    %v159 = vstv %s158
    %vm160 = vcmp.eq.s32.totalorder %v159, 1
    %vm161 = vmand %vm160, %vm142
    %vm162 = vmand %vm160, %vm143
    %vm163 = vmand %vm160, %vm144
    %vm164 = vmand %vm160, %vm145
    %vm165 = vmand %vm160, %vm146
    %vm166 = vmand %vm160, %vm147
    %vm167 = vmand %vm160, %vm148
    %vm168 = vmand %vm160, %vm149
    %vm169 = vmand %vm160, %vm150
    %vm170 = vmand %vm160, %vm151
    %vm171 = vmand %vm160, %vm152
    %vm172 = vmand %vm160, %vm153
    %vm173 = vmand %vm160, %vm154
    %vm174 = vmand %vm160, %vm155
    %vm175 = vmand %vm160, %vm156
    %vm176 = vmand %vm160, %vm157
    %v177 = vsel %vm161, %v140, 0.0
    %v178 = vsel %vm162, %v140, 0.0
    %v179 = vsel %vm163, %v140, 0.0
    %v180 = vsel %vm164, %v140, 0.0
    %v181 = vsel %vm165, %v140, 0.0
    %v182 = vsel %vm166, %v140, 0.0
    %v183 = vsel %vm167, %v140, 0.0
    %v184 = vsel %vm168, %v140, 0.0
    %v185 = vsel %vm169, %v140, 0.0
    %v186 = vsel %vm170, %v140, 0.0
    %v187 = vsel %vm171, %v140, 0.0
    %v188 = vsel %vm172, %v140, 0.0
    %v189 = vsel %vm173, %v140, 0.0
    %v190 = vsel %vm174, %v140, 0.0
    %v191 = vsel %vm175, %v140, 0.0
    %v192 = vsel %vm176, %v140, 0.0
    %v193 = vsub.f32 %v37, %v177
    %v194 = vsub.f32 %v38, %v178
    %v195 = vsub.f32 %v39, %v179
    %v196 = vsub.f32 %v40, %v180
    %v197 = vsub.f32 %v41, %v181
    %v198 = vsub.f32 %v42, %v182
    %v199 = vsub.f32 %v43, %v183
    %v200 = vsub.f32 %v44, %v184
    %v201 = vsub.f32 %v45, %v185
    %v202 = vsub.f32 %v46, %v186
    %v203 = vsub.f32 %v47, %v187
    %v204 = vsub.f32 %v48, %v188
    %v205 = vsub.f32 %v49, %v189
    %v206 = vsub.f32 %v50, %v190
    %v207 = vsub.f32 %v51, %v191
    %v208 = vsub.f32 %v52, %v192
    %v209 = vld [vmem:[%s4] sm:$0x1]
    %211 = vset.pattern.permute.xlu0 0
    %212 = vperm.xlu0 %211, %v208
    %v213 = vpop.permute.xlu0 %212
    %v214 = vlaneseq
    %v215 = vshrl.u32 %v214, 7
    %v216 = vsub.s32 7, %v215
    %v217 = vrot.slane %v213, %v216
    %v219 = vmul.f32 %v209, %v217
    %221 = vset.pattern.permute.xlu0 0
    %222 = vperm.xlu0 %221, %v193
    %v223 = vpop.permute.xlu0 %222
    %226 = vset.pattern.permute.xlu0 0
    %227 = vperm.xlu0 %226, %v194
    %v228 = vpop.permute.xlu0 %227
    %231 = vset.pattern.permute.xlu0 0
    %232 = vperm.xlu0 %231, %v195
    %v233 = vpop.permute.xlu0 %232
    %236 = vset.pattern.permute.xlu0 0
    %237 = vperm.xlu0 %236, %v196
    %v238 = vpop.permute.xlu0 %237
    %241 = vset.pattern.permute.xlu0 0
    %242 = vperm.xlu0 %241, %v197
    %v243 = vpop.permute.xlu0 %242
    %246 = vset.pattern.permute.xlu0 0
    %247 = vperm.xlu0 %246, %v198
    %v248 = vpop.permute.xlu0 %247
    %251 = vset.pattern.permute.xlu0 0
    %252 = vperm.xlu0 %251, %v199
    %v253 = vpop.permute.xlu0 %252
    %256 = vset.pattern.permute.xlu0 0
    %257 = vperm.xlu0 %256, %v200
    %v258 = vpop.permute.xlu0 %257
    %261 = vset.pattern.permute.xlu0 0
    %262 = vperm.xlu0 %261, %v201
    %v263 = vpop.permute.xlu0 %262
    %266 = vset.pattern.permute.xlu0 0
    %267 = vperm.xlu0 %266, %v202
    %v268 = vpop.permute.xlu0 %267
    %271 = vset.pattern.permute.xlu0 0
    %272 = vperm.xlu0 %271, %v203
    %v273 = vpop.permute.xlu0 %272
    %276 = vset.pattern.permute.xlu0 0
    %277 = vperm.xlu0 %276, %v204
    %v278 = vpop.permute.xlu0 %277
    %281 = vset.pattern.permute.xlu0 0
    %282 = vperm.xlu0 %281, %v205
    %v283 = vpop.permute.xlu0 %282
    %286 = vset.pattern.permute.xlu0 0
    %287 = vperm.xlu0 %286, %v206
    %v288 = vpop.permute.xlu0 %287
    %291 = vset.pattern.permute.xlu0 0
    %292 = vperm.xlu0 %291, %v207
    %v293 = vpop.permute.xlu0 %292
    %v297 = vlaneseq
    %v298 = vshrl.u32 %v297, 7
    %v299 = vsub.s32 0, %v298
    %v300 = vrot.slane %v219, %v299
    %vm302 = vcmp.le.f32.partialorder %v223, %v300
    %vm303 = vcmp.le.f32.partialorder %v228, %v300
    %vm304 = vcmp.le.f32.partialorder %v233, %v300
    %vm305 = vcmp.le.f32.partialorder %v238, %v300
    %vm306 = vcmp.le.f32.partialorder %v243, %v300
    %vm307 = vcmp.le.f32.partialorder %v248, %v300
    %vm308 = vcmp.le.f32.partialorder %v253, %v300
    %vm309 = vcmp.le.f32.partialorder %v258, %v300
    %vm310 = vcmp.le.f32.partialorder %v263, %v300
    %vm311 = vcmp.le.f32.partialorder %v268, %v300
    %vm312 = vcmp.le.f32.partialorder %v273, %v300
    %vm313 = vcmp.le.f32.partialorder %v278, %v300
    %vm314 = vcmp.le.f32.partialorder %v283, %v300
    %vm315 = vcmp.le.f32.partialorder %v288, %v300
    %vm316 = vcmp.le.f32.partialorder %v293, %v300
    %vm317 = vcmp.le.f32.partialorder %v213, %v300
    %v318 = vsel %vm302, 1, 0
    %v319 = vsel %vm303, 1, 0
    %v320 = vsel %vm304, 1, 0
    %v321 = vsel %vm305, 1, 0
    %v322 = vsel %vm306, 1, 0
    %v323 = vsel %vm307, 1, 0
    %v324 = vsel %vm308, 1, 0
    %v325 = vsel %vm309, 1, 0
    %v326 = vsel %vm310, 1, 0
    %v327 = vsel %vm311, 1, 0
    %v328 = vsel %vm312, 1, 0
    %v329 = vsel %vm313, 1, 0
    %v330 = vsel %vm314, 1, 0
    %v331 = vsel %vm315, 1, 0
    %v332 = vsel %vm316, 1, 0
    %v333 = vsel %vm317, 1, 0
    %vm334 = vcmask 130048
    %v335 = vsel %vm334, %v318, 0
    %v336 = vsel %vm334, %v319, 0
    %v337 = vsel %vm334, %v320, 0
    %v338 = vsel %vm334, %v321, 0
    %v339 = vsel %vm334, %v322, 0
    %v340 = vadd.s32 %v335, %v339
    %v341 = vsel %vm334, %v323, 0
    %v342 = vadd.s32 %v336, %v341
    %v343 = vsel %vm334, %v324, 0
    %v344 = vadd.s32 %v337, %v343
    %v345 = vsel %vm334, %v325, 0
    %v346 = vadd.s32 %v338, %v345
    %v347 = vsel %vm334, %v326, 0
    %v348 = vadd.s32 %v340, %v347
    %v349 = vsel %vm334, %v327, 0
    %v350 = vadd.s32 %v342, %v349
    %v351 = vsel %vm334, %v328, 0
    %v352 = vadd.s32 %v344, %v351
    %v353 = vsel %vm334, %v329, 0
    %v354 = vadd.s32 %v346, %v353
    %v355 = vsel %vm334, %v330, 0
    %v356 = vadd.s32 %v348, %v355
    %v357 = vsel %vm334, %v331, 0
    %v358 = vadd.s32 %v350, %v357
    %v359 = vsel %vm334, %v332, 0
    %v360 = vadd.s32 %v352, %v359
    %v361 = vsel %vm334, %v333, 0
    %v362 = vadd.s32 %v354, %v361
    %v363 = vadd.s32 %v356, %v358
    %v364 = vadd.s32 %v360, %v362
    %v365 = vadd.s32 %v363, %v364
    %v366 = vrot.slane %v365, 4
    %v367 = vadd.s32 %v365, %v366
    %v368 = vrot.slane %v367, 2
    %v369 = vadd.s32 %v367, %v368
    %v370 = vrot.slane %v369, 1
    %v371 = vadd.s32 %v369, %v370
    %vm372 = vcmp.lt.s32.totalorder %v371, 127
    %v373 = vsel %vm372, %v371, 127
    %vm374 = vcmask 122880
    %375 = vst.msk [vmem:[#allocation5] sm:$0x1] %vm374, %v373
    // Predicated region
    $region14: #{tpu_custom_call.1} parent=1 // pred_check
      _
    $region15: #{tpu_custom_call.1} parent=1 // pred_check_branch
      %377 = sbr.rel (0) target = $region17
    $region16: #{tpu_custom_call.1} parent=1 // pred_region
      %s379 = ssub.s32 16, 16
      %380 = vsyncadd [#allocation6], %s379
      %s382 = sshll.u32 [#allocation5], 4
      %s383 = int_to_ptr.vmem [resolvable:$true] %s382
      %385 = dma.vmem_to_hbm [thread:$0]  %s383, 16, %s5, [#allocation6]
    $region17: #{tpu_custom_call.1} parent=1 // pred_fallthru
      _
    // Predicated region
    $region18: #{tpu_custom_call.1} parent=1 // pred_check
      _
    $region19: #{tpu_custom_call.1} parent=1 // pred_check_branch
      %387 = sbr.rel (0) target = $region21
    $region20: #{tpu_custom_call.1} parent=1 // pred_region
      %388 = dma.done [#allocation6], 16
    $region21: #{tpu_custom_call.1} parent=1 // pred_fallthru
      _
    %389 = vsyncpa [#allocation6], 1

</llo_original>
